<compile_context>
chip_gen: v5e
topology: v5e:2x2
jax: 0.10.0
libtpu: 0.0.40
codegen_flags: <defaults>
</compile_context>

<pallas_src>
import functools

import jax
import jax.numpy as jnp
from jax.experimental import pallas as pl
from jax.experimental.pallas import tpu as pltpu


def _round_up(x, m):
    return ((x + m - 1) // m) * m


def _pick_row_tile(M, target=4096, min_steps=4):
    """Largest row tile <= target that is a multiple of 16 (bf16 sublane
    packing); prefers an exact divisor of M (no padding, no output slice)
    while keeping >= min_steps grid steps for megacore splitting."""
    if M <= target:
        return _round_up(M, 16)          # single tile for small problems
    for tm in range(target - (target % 16), 15, -16):
        if M % tm == 0 and M // tm >= min_steps:
            return tm
    return target                        # fallback: pad M up to a multiple


def _proj_kernel(x_ref, w_ref, b_ref, o_ref):
    # x_ref: (TM, K) bf16, w_ref: (K, D) bf16, b_ref: (1, D) f32, o_ref: (TM, D)
    acc = jnp.dot(x_ref[...], w_ref[...], preferred_element_type=jnp.float32)
    o_ref[...] = (acc + b_ref[...]).astype(o_ref.dtype)


@functools.partial(jax.jit, static_argnames=("patch_size", "out_dtype"))
def patch_embed_forward(x, weight, bias, patch_size, out_dtype=jnp.bfloat16):
    """x: (B, C, H, W); weight: (D, C, p, p); bias: (D,).
    Returns (B, N, D) with N = (H//p)*(W//p), matching PyTorch PatchEmbed
    (output in bf16 by default for downstream bf16 attention/norm)."""
    B, C, H, W = x.shape
    p = patch_size
    D = weight.shape[0]
    assert H % p == 0 and W % p == 0
    Ho, Wo = H // p, W // p
    N = Ho * Wo
    K = C * p * p
    M = B * N

    # --- patch extraction (XLA): (B,C,H,W) -> (M, K), feature order (c,ph,pw)
    # matches Conv2d weight flattening.  Cast to bf16 *before* the transpose so
    # the materialized intermediate is the small unpadded bf16 matrix.
    xp = x.astype(jnp.bfloat16)
    xp = xp.reshape(B, C, Ho, p, Wo, p)          # free contiguous split
    xp = xp.transpose(0, 2, 4, 1, 3, 5)          # (B, Ho, Wo, C, p, p)
    xp = xp.reshape(M, K)                        # (M, K) bf16

    w2d = weight.reshape(D, K).T.astype(jnp.bfloat16)    # (K, D) bf16
    b2d = bias.reshape(1, D).astype(jnp.float32)         # (1, D) f32

    TM = _pick_row_tile(M)
    Mp = _round_up(M, TM)
    if Mp != M:                                   # only on the fallback path
        xp = jnp.pad(xp, ((0, Mp - M), (0, 0)))

    cost = pl.CostEstimate(
        flops=2 * M * K * D,
        transcendentals=0,
        bytes_accessed=(Mp * K * 2 + K * D * 2 + D * 4
                        + Mp * D * jnp.dtype(out_dtype).itemsize),
    )

    out = pl.pallas_call(
        _proj_kernel,
        out_shape=jax.ShapeDtypeStruct((Mp, D), out_dtype),
        grid_spec=pltpu.PrefetchScalarGridSpec(
            num_scalar_prefetch=0,
            grid=(Mp // TM,),
            in_specs=[
                pl.BlockSpec((TM, K), lambda i: (i, 0)),   # row tiles stream
                pl.BlockSpec((K, D), lambda i: (0, 0)),    # weight resident
                pl.BlockSpec((1, D), lambda i: (0, 0)),    # bias resident
            ],
            out_specs=pl.BlockSpec((TM, D), lambda i: (i, 0)),
        ),
        compiler_params=pltpu.CompilerParams(
            dimension_semantics=("parallel",),      # splits over 2 TCs on v7x
            vmem_limit_bytes=32 * 1024 * 1024,      # safe on v5e/v6e/v7x
        ),
        cost_estimate=cost,
    )(xp, w2d, b2d)

    if Mp != M:
        out = out[:M]
    return out.reshape(B, N, D)


if __name__ == "__main__":
    # Small shapes consistent with the module: img 16x16, patch 4, C=4, D=32
    B, C, H, W = 2, 4, 16, 16
    patch = 4
    embed_dim = 32

    key = jax.random.PRNGKey(0)
    kx, kw, kb = jax.random.split(key, 3)
    x = jax.random.normal(kx, (B, C, H, W), dtype=jnp.float32)
    # Deterministic synthetic Conv2d parameters (shape per nn.Conv2d __init__)
    weight = jax.random.normal(kw, (embed_dim, C, patch, patch),
                               dtype=jnp.float32) * 0.02
    bias = jax.random.normal(kb, (embed_dim,), dtype=jnp.float32) * 0.02

    out = patch_embed_forward(x, weight, bias, patch)
    out = jax.block_until_ready(out)

    # Reference: XLA conv in f32 (NCHW, stride=kernel=patch) -> flatten+transpose
    ref = jax.lax.conv_general_dilated(
        x, weight, window_strides=(patch, patch), padding="VALID",
        dimension_numbers=("NCHW", "OIHW", "NCHW"))
    ref = ref + bias.reshape(1, embed_dim, 1, 1)
    ref = ref.reshape(B, embed_dim, -1).transpose(0, 2, 1)  # (B, N, D)

    assert out.shape == (B, (H // patch) * (W // patch), embed_dim)
    # bf16 inputs/outputs (f32 accumulate) => relaxed tolerance vs f32 reference.
    assert jnp.allclose(out.astype(jnp.float32), ref, atol=2e-2, rtol=2e-2)
    print("KERNEL_OK")
</pallas_src>

<mosaic_0001>
module attributes {stable_mosaic.version = 11 : i64} {
  func.func @_proj_kernel(%arg0: i32, %arg1: memref<32x64xbf16, #tpu.memory_space<vmem>>, %arg2: memref<64x32xbf16, #tpu.memory_space<vmem>>, %arg3: memref<1x32xf32, #tpu.memory_space<vmem>>, %arg4: memref<32x32xbf16, #tpu.memory_space<vmem>>) attributes {dimension_semantics = [#tpu.dimension_semantics<parallel>], iteration_bounds = array<i64: 1>, scalar_prefetch = 0 : i64, scratch_operands = 0 : i64, tpu.core_type = #tpu.core_type<tc>, window_params = [{transform_indices = @transform_0, window_bounds = array<i64: 32, 64>}, {pipeline_mode = #tpu.pipeline_mode<synchronous>, transform_indices = @transform_1, window_bounds = array<i64: 64, 32>}, {pipeline_mode = #tpu.pipeline_mode<synchronous>, transform_indices = @transform_2, window_bounds = array<i64: 1, 32>}, {transform_indices = @transform_3, window_bounds = array<i64: 32, 32>}]} {
    %c0 = arith.constant 0 : index
    %c0_0 = arith.constant 0 : index
    %0 = vector.load %arg1[%c0, %c0_0] : memref<32x64xbf16, #tpu.memory_space<vmem>>, vector<32x64xbf16>
    %c0_1 = arith.constant 0 : index
    %c0_2 = arith.constant 0 : index
    %1 = vector.load %arg2[%c0_1, %c0_2] : memref<64x32xbf16, #tpu.memory_space<vmem>>, vector<64x32xbf16>
    %cst = arith.constant dense<0.000000e+00> : vector<32x32xf32>
    %2 = tpu.matmul %0, %1, %cst {dimension_numbers = #tpu.dot_dimension_numbers<[1], [0], [0], [1], [0, 0, 1, 1], [], []>} : vector<32x64xbf16>, vector<64x32xbf16>, vector<32x32xf32> -> vector<32x32xf32>
    %c0_3 = arith.constant 0 : index
    %c0_4 = arith.constant 0 : index
    %3 = vector.load %arg3[%c0_3, %c0_4] : memref<1x32xf32, #tpu.memory_space<vmem>>, vector<1x32xf32>
    %4 = vector.broadcast %3 : vector<1x32xf32> to vector<32x32xf32>
    %5 = arith.addf %2, %4 : vector<32x32xf32>
    %6 = arith.truncf %5 : vector<32x32xf32> to vector<32x32xbf16>
    %c0_5 = arith.constant 0 : index
    %c0_6 = arith.constant 0 : index
    %7 = vector.load %arg4[%c0_5, %c0_6] : memref<32x32xbf16, #tpu.memory_space<vmem>>, vector<32x32xbf16>
    tpu.vector_store %arg4[%c0_5, %c0_6], %6 {strides = array<i32>} : memref<32x32xbf16, #tpu.memory_space<vmem>>, vector<32x32xbf16>,
    return
  }
  func.func @transform_0(%arg0: i32) -> (i32, i32) {
    %c0_i32 = arith.constant 0 : i32
    %c0_i32_0 = arith.constant 0 : i32
    return %arg0, %c0_i32 : i32, i32
  }
  func.func @transform_1(%arg0: i32) -> (i32, i32) {
    %c0_i32 = arith.constant 0 : i32
    %c0_i32_0 = arith.constant 0 : i32
    %c0_i32_1 = arith.constant 0 : i32
    return %c0_i32, %c0_i32_0 : i32, i32
  }
  func.func @transform_2(%arg0: i32) -> (i32, i32) {
    %c0_i32 = arith.constant 0 : i32
    %c0_i32_0 = arith.constant 0 : i32
    %c0_i32_1 = arith.constant 0 : i32
    return %c0_i32, %c0_i32_0 : i32, i32
  }
  func.func @transform_3(%arg0: i32) -> (i32, i32) {
    %c0_i32 = arith.constant 0 : i32
    %c0_i32_0 = arith.constant 0 : i32
    return %arg0, %c0_i32 : i32, i32
  }
}

</mosaic_0001>

<llo_original>
// kernel: patch_embed_forward.1
$region0: #{patch_embed_forward.1}
  #allocation0 [shape = 'u32[]', space=smem, size = 0x4, offset = 0x4, fixed_abs, tag = 'smem constant byte address 0x4 - core index']
  #allocation1 [shape = 'u32[72,128]{1,0:T(1,128)}', space=vmem, size = 0x9000, scoped, tag = 'internal scratch']
  %s0 = inlined_call_operand.vmem [shape: bf16[32,64], index: 0, kind: input, shape index: {}]
  %s1 = inlined_call_operand.vmem [shape: bf16[64,32], index: 1, kind: input, shape index: {}]
  %s2 = inlined_call_operand.vmem [shape: f32[1,32], index: 2, kind: input, shape index: {}]
  %s3 = inlined_call_operand.hbm [shape: bf16[32,32], index: 3, kind: output, shape index: {}]
  %s4 = sld [smem:[#allocation0]]
  $region22: #{patch_embed_forward.1} parent=0
    _
  %s6 = ssub.s32 1, %s4
  %s7 = scalar_select 0, %s6, %s4
  $region1: #{patch_embed_forward.1} parent=0
    #allocation2 [shape = 'u8[8192]{0}', space=vmem, size = 0x2000, scoped, tag = 'output window, operand 0, single buffered']
    #allocation3 [shape = 's32[1]{0}', space=sflag, size = 0x4, scoped, tag = 'scoped memory for patch_embed_forward.1']
    %8 = vsyncpa [#allocation3], 0
    // Predicated region
    $region2: #{patch_embed_forward.1} parent=1 // pred_check
      _
    $region3: #{patch_embed_forward.1} parent=1 // pred_check_branch
      %10 = sbr.rel (0) target = $region5
    $region4: #{patch_embed_forward.1} parent=1 // pred_region
      _
    $region5: #{patch_embed_forward.1} parent=1 // pred_fallthru
      _
    // Predicated region
    $region6: #{patch_embed_forward.1} parent=1 // pred_check
      _
    $region7: #{patch_embed_forward.1} parent=1 // pred_check_branch
      %12 = sbr.rel (0) target = $region9
    $region8: #{patch_embed_forward.1} parent=1 // pred_region
      _
    $region9: #{patch_embed_forward.1} parent=1 // pred_fallthru
      _
    // Predicated region
    $region10: #{patch_embed_forward.1} parent=1 // pred_check
      _
    $region11: #{patch_embed_forward.1} parent=1 // pred_check_branch
      %14 = sbr.rel (0) target = $region13
    $region12: #{patch_embed_forward.1} parent=1 // pred_region
      _
    $region13: #{patch_embed_forward.1} parent=1 // pred_fallthru
      _
    %v16 = vld [vmem:[%s0] sm:$0xf]
    %v17 = vld [vmem:[%s0 + $0x4] sm:$0xf]
    %v18 = vld [vmem:[%s0 + $0x8] sm:$0xf]
    %v19 = vld [vmem:[%s0 + $0xc] sm:$0xf]
    %v20 = vld [vmem:[%s1] sm:$0xf]
    %v21 = vld [vmem:[%s1 + $0x4] sm:$0xf]
    %v22 = vld [vmem:[%s1 + $0x8] sm:$0xf]
    %v23 = vld [vmem:[%s1 + $0xc] sm:$0xf]
    %v24 = vld [vmem:[%s1 + $0x10] sm:$0xf]
    %v25 = vld [vmem:[%s1 + $0x14] sm:$0xf]
    %v26 = vld [vmem:[%s1 + $0x18] sm:$0xf]
    %v27 = vld [vmem:[%s1 + $0x1c] sm:$0xf]
    %v28 = vld [vmem:[%s2] sm:$0x1]
    %v30 = vperm.slane %v28, 0
    %v36 = vunpack.c.l.b16 %v16
    %v37 = vunpack.c.l.b16 %v17
    %v38 = vunpack.c.l.b16 %v18
    %v39 = vunpack.c.l.b16 %v19
    %v40 = vpack.c.b16 %v37, %v36
    %v41 = vpack.c.b16 %v39, %v38
    %v50 = vunpack.c.l.b16 %v20
    %v51 = vunpack.c.l.b16 %v21
    %v52 = vunpack.c.l.b16 %v22
    %v53 = vunpack.c.l.b16 %v23
    %v54 = vunpack.c.l.b16 %v24
    %v55 = vunpack.c.l.b16 %v25
    %v56 = vunpack.c.l.b16 %v26
    %v57 = vunpack.c.l.b16 %v27
    %v58 = vpack.c.b16 %v51, %v50
    %v59 = vpack.c.b16 %v53, %v52
    %v60 = vpack.c.b16 %v55, %v54
    %v61 = vpack.c.b16 %v57, %v56
    %vm66 = vcmask 523264
    %v68 = vsel %vm66, %v40, 0
    %v71 = vsel %vm66, %v41, 0
    %73 = vmatpush.bf16.msra.mxu0 0
    %74 = vmatpush.bf16.msra.mxu0 0
    %75 = vmatpush.bf16.msra.mxu0 0
    %76 = vmatpush.bf16.msra.mxu0 0
    %77 = vmatpush.bf16.msra.mxu0 %v61
    %78 = vmatpush.bf16.msra.mxu0 %v60
    %79 = vmatpush.bf16.msra.mxu0 %v59
    %80 = vmatpush.bf16.msra.mxu0 %v58
    %81 = vmatmul.bf16.gmra.mxu0 %v68
    %v82 = vpop.f32.mrf.mxu0
    %v83 = vadd.f32 %v30, %v82
    %v84 = vpop.f32.mrf.mxu0
    %v85 = vadd.f32 %v30, %v84
    %86 = vmatmul.bf16.gmra.mxu0 %v71
    %v87 = vpop.f32.mrf.mxu0
    %v88 = vadd.f32 %v30, %v87
    %v89 = vpop.f32.mrf.mxu0
    %v90 = vadd.f32 %v30, %v89
    %91 = vdwg.mxu0
    %v92 = vpack.c.bf16 %v83, %v83
    %v93 = vpack.c.bf16 %v85, %v85
    %v94 = vpack.c.bf16 %v88, %v88
    %v95 = vpack.c.bf16 %v90, %v90
    %vm96 = vcmask 257024
    %97 = vst.msk [vmem:[#allocation2] sm:$0xf] %vm96, %v92
    %98 = vst.msk [vmem:[#allocation2 + $0x4] sm:$0xf] %vm96, %v93
    %99 = vst.msk [vmem:[#allocation2 + $0x8] sm:$0xf] %vm96, %v94
    %100 = vst.msk [vmem:[#allocation2 + $0xc] sm:$0xf] %vm96, %v95
    // Predicated region
    $region14: #{patch_embed_forward.1} parent=1 // pred_check
      _
    $region15: #{patch_embed_forward.1} parent=1 // pred_check_branch
      %102 = sbr.rel (0) target = $region17
    $region16: #{patch_embed_forward.1} parent=1 // pred_region
      %104 = vsyncadd [#allocation3], 0
      %s105 = sshll.u32 [#allocation2], 4
      %s106 = int_to_ptr.vmem [resolvable:$true] %s105
      %s107 = sshll.u32 %s3, 4
      %s108 = int_to_ptr.hbm [resolvable:$true] %s107
      %113 = dma.vmem_to_hbm [thread:$0]  %s106, 256, %s108, [#allocation3], 64, 64, 4
    $region17: #{patch_embed_forward.1} parent=1 // pred_fallthru
      _
    // Predicated region
    $region18: #{patch_embed_forward.1} parent=1 // pred_check
      _
    $region19: #{patch_embed_forward.1} parent=1 // pred_check_branch
      %115 = sbr.rel (0) target = $region21
    $region20: #{patch_embed_forward.1} parent=1 // pred_region
      %117 = dma.done [#allocation3], 256
    $region21: #{patch_embed_forward.1} parent=1 // pred_fallthru
      _
    %118 = vsyncpa [#allocation3], 1

</llo_original>
